<compile_context>
chip_gen: v6e
topology: v6e:2x2x1
jax: 0.10.0
libtpu: 0.0.40
codegen_flags: <defaults>
</compile_context>

<pallas_src>
import functools

import jax
import jax.numpy as jnp
from jax import lax
from jax.experimental import pallas as pl
from jax.experimental.pallas import tpu as pltpu

_EPS_SQ = 1e-16  # (F.cosine_similarity eps=1e-8)^2, applied to the squared norm.


def _normalize(x):
    x = x.astype(jnp.float32)
    ss = jnp.sum(x * x, axis=-1, keepdims=True)
    return x * lax.rsqrt(jnp.maximum(ss, _EPS_SQ))


def _ntxent_kernel(t_row_ref, s_row_ref, col_ref,
                   loss_t_ref, loss_s_ref,
                   denom_t, denom_s,
                   *, inv_temp):
    """One (row-tile, column-tile) step of the NT-Xent denominator sweep.

    t_row_ref / s_row_ref : (TM, D) normalized target / surrogate rows.
    col_ref               : (TN, D) normalized [target; surrogate] columns,
                            pre-scaled by 1/temperature.
    """
    j = pl.program_id(1)

    @pl.when(j == 0)
    def _init():
        denom_t[...] = jnp.zeros_like(denom_t)
        denom_s[...] = jnp.zeros_like(denom_s)

    col = col_ref[...]                          # (TN, D), already * inv_temp

    def gram_exp(row):                          # (TM, D) x (TN, D)^T -> exp
        g = lax.dot_general(row, col,
                            dimension_numbers=(((1,), (1,)), ((), ())),
                            preferred_element_type=jnp.float32)
        return jnp.exp(g)                       # exp(sim * inv_temp), f32

    denom_t[...] += jnp.sum(gram_exp(t_row_ref[...]), axis=1, keepdims=True)
    denom_s[...] += jnp.sum(gram_exp(s_row_ref[...]), axis=1, keepdims=True)

    @pl.when(j == pl.num_programs(1) - 1)
    def _finalize():
        zt = t_row_ref[...].astype(jnp.float32)
        zs = s_row_ref[...].astype(jnp.float32)
        # positives: cos(t_i, s_i) == cos(s_i, t_i) -> shared by both halves.
        pos = jnp.sum(zt * zs, axis=-1, keepdims=True) * inv_temp     # (TM,1)
        self_t = jnp.sum(zt * zt, axis=-1, keepdims=True) * inv_temp  # ~1/T
        self_s = jnp.sum(zs * zs, axis=-1, keepdims=True) * inv_temp
        d_t = denom_t[...] - jnp.exp(self_t)    # drop the diagonal term
        d_s = denom_s[...] - jnp.exp(self_s)
        # -log(exp(pos/T) / denom) == log(denom) - pos/T
        loss_t_ref[...] = jnp.log(d_t) - pos
        loss_s_ref[...] = jnp.log(d_s) - pos


def _pick_tile(n, max_tile):
    for c in (1024, 512, 256, 128, 64, 32, 16, 8):
        if c <= max_tile and n % c == 0:
            return c
    # TODO(synk): prime/odd N falls back to the full (untiled) dimension; a
    # masked/padded column path would be needed to tile it.
    return n


def contrastive_loss(emb_target, emb_surrogate, temperature=0.5, *,
                     matmul_dtype=None, max_tile=None):
    assert emb_target.shape == emb_surrogate.shape and emb_target.ndim == 2
    n, d = emb_target.shape
    inv_temp = 1.0 / float(temperature)

    # For small D the single EUP (exp) saturates before the MXU, so bf16
    # operands only add cast work; use bf16 only when the matmul dominates.
    if matmul_dtype is None:
        matmul_dtype = jnp.bfloat16 if d > 256 else jnp.float32
    itemsize = jnp.dtype(matmul_dtype).itemsize

    # --- one-shot normalization + temperature fold (tiny memory-bound pass) ---
    z_t = _normalize(emb_target)
    z_s = _normalize(emb_surrogate)
    rows_t = z_t.astype(matmul_dtype)                                  # (N, D)
    rows_s = z_s.astype(matmul_dtype)                                  # (N, D)
    cols = (jnp.concatenate([z_t, z_s], axis=0) * inv_temp).astype(matmul_dtype)  # (2N, D)

    # --- tile selection against an explicit VMEM budget ---------------------
    if max_tile is not None:
        want_row = want_col = max_tile
    else:
        # Bigger row tile -> higher flop/byte; 512 (bf16) crosses the v6e
        # roofline, 256 is already compute-bound on v5e/v7x. Columns stay
        # matched to the 256-wide MXU.
        want_row = 512 if itemsize < 4 else 256
        want_col = 256

    tm = _pick_tile(n, want_row)
    tn = _pick_tile(2 * n, want_col)

    def _footprint(tm_, tn_):
        in_bytes = 2 * (2 * tm_ * d + tn_ * d) * itemsize   # double-buffered inputs
        tmp_bytes = 4 * tm_ * tn_ * 4                        # gram/exp f32 temporaries
        return in_bytes + tmp_bytes

    budget = 24 << 20   # keeps us well inside scoped VMEM on every generation
    while _footprint(tm, tn) > budget:
        new_tm = _pick_tile(n, tm // 2) if tm > 8 else tm
        new_tn = _pick_tile(2 * n, tn // 2) if tn > 8 else tn
        if tm >= tn and new_tm < tm:
            tm = new_tm
        elif new_tn < tn:
            tn = new_tn
        elif new_tm < tm:
            tm = new_tm
        else:
            break

    # Keep the "parallel" row axis >= 2 blocks so v7x's two TensorCores both
    # get work (no-op on v5e/v6e single-core parts).
    if n // tm < 2 and n >= 16:
        cand = _pick_tile(n, max(tm // 2, 8))
        if cand < tm:
            tm = cand

    foot = _footprint(tm, tn)
    vmem_limit = max(foot + (4 << 20), 16 << 20)
    if foot + (4 << 20) <= (48 << 20):
        vmem_limit = min(vmem_limit, 48 << 20)   # headroom under v7x's 64 MiB

    kernel = functools.partial(_ntxent_kernel, inv_temp=inv_temp)

    row_spec = pl.BlockSpec((tm, d), lambda i, j: (i, 0))
    col_spec = pl.BlockSpec((tn, d), lambda i, j: (j, 0))
    out_spec = pl.BlockSpec((tm, 1), lambda i, j: (i, 0))

    loss_t, loss_s = pl.pallas_call(
        kernel,
        out_shape=(jax.ShapeDtypeStruct((n, 1), jnp.float32),
                   jax.ShapeDtypeStruct((n, 1), jnp.float32)),
        grid=(n // tm, (2 * n) // tn),
        in_specs=[row_spec, row_spec, col_spec],
        out_specs=(out_spec, out_spec),
        scratch_shapes=[pltpu.VMEM((tm, 1), jnp.float32),
                        pltpu.VMEM((tm, 1), jnp.float32)],
        compiler_params=pltpu.CompilerParams(
            dimension_semantics=("parallel", "arbitrary"),
            vmem_limit_bytes=int(vmem_limit)),
    )(rows_t, rows_s, cols)

    # Tiny glue reduction over the 2N per-row partial losses.
    return (jnp.sum(loss_t) + jnp.sum(loss_s)) / (2 * n)


def _reference(emb_target, emb_surrogate, temperature=0.5):
    # Pure-JAX reference mirroring the PyTorch module (for sanity checking).
    n = emb_target.shape[0]
    reps = jnp.concatenate([emb_target, emb_surrogate], axis=0)
    norm = jnp.maximum(jnp.linalg.norm(reps, axis=-1, keepdims=True), 1e-8)
    z = reps / norm
    sim = z @ z.T
    sim_ij = jnp.diagonal(sim, offset=n)
    sim_ji = jnp.diagonal(sim, offset=-n)
    positives = jnp.concatenate([sim_ij, sim_ji], axis=0)
    neg_mask = 1.0 - jnp.eye(2 * n)
    nominator = jnp.exp(positives / temperature)
    denominator = jnp.sum(neg_mask * jnp.exp(sim / temperature), axis=1)
    loss_partial = -jnp.log(nominator / denominator)
    return jnp.sum(loss_partial) / (2 * n)


if __name__ == "__main__":
    temperature = 0.5  # deterministic buffer value, as in __init__

    k1, k2, k3, k4 = jax.random.split(jax.random.PRNGKey(0), 4)

    # 1) Small smoke test (single grid step: TM = batch, TN = 2*batch).
    t4 = jax.random.normal(k1, (4, 32), dtype=jnp.float32)
    s4 = jax.random.normal(k2, (4, 32), dtype=jnp.float32)
    loss4 = jax.block_until_ready(contrastive_loss(t4, s4, temperature))
    ref4 = _reference(t4, s4, temperature)
    assert jnp.allclose(loss4, ref4, rtol=1e-5, atol=1e-5), (loss4, ref4)

    # 2) Multi-tile path: 2 parallel row tiles x 4 column (reduction) tiles.
    t16 = jax.random.normal(k3, (16, 32), dtype=jnp.float32)
    s16 = jax.random.normal(k4, (16, 32), dtype=jnp.float32)
    loss16 = jax.block_until_ready(
        contrastive_loss(t16, s16, temperature, max_tile=8))
    ref16 = _reference(t16, s16, temperature)
    assert jnp.allclose(loss16, ref16, rtol=1e-5, atol=1e-5), (loss16, ref16)

    # 3) bf16 HBM storage + bf16 MXU operands (f32 accumulation): throughput
    #    path, looser parity.
    loss_bf16 = jax.block_until_ready(
        contrastive_loss(t16, s16, temperature,
                         matmul_dtype=jnp.bfloat16, max_tile=8))
    assert jnp.allclose(loss_bf16, ref16, rtol=5e-2, atol=5e-2), (loss_bf16, ref16)

    # 4) Moderate shape exercising the auto tile / VMEM-budget / megacore path.
    ta = jax.random.normal(k1, (128, 256), dtype=jnp.float32)
    sa = jax.random.normal(k2, (128, 256), dtype=jnp.float32)
    lossa = jax.block_until_ready(contrastive_loss(ta, sa, temperature))
    refa = _reference(ta, sa, temperature)
    assert jnp.allclose(lossa, refa, rtol=1e-5, atol=1e-5), (lossa, refa)

    print("KERNEL_OK")
</pallas_src>

<mosaic_0001>
module attributes {stable_mosaic.version = 11 : i64} {
  func.func @_ntxent_kernel(%arg0: i32, %arg1: i32, %arg2: memref<4x32xf32, #tpu.memory_space<vmem>>, %arg3: memref<4x32xf32, #tpu.memory_space<vmem>>, %arg4: memref<8x32xf32, #tpu.memory_space<vmem>>, %arg5: memref<4x1xf32, #tpu.memory_space<vmem>>, %arg6: memref<4x1xf32, #tpu.memory_space<vmem>>, %arg7: memref<4x1xf32, #tpu.memory_space<vmem>>, %arg8: memref<4x1xf32, #tpu.memory_space<vmem>>) attributes {dimension_semantics = [#tpu.dimension_semantics<parallel>, #tpu.dimension_semantics<arbitrary>], iteration_bounds = array<i64: 1, 1>, scalar_prefetch = 0 : i64, scratch_operands = 2 : i64, tpu.core_type = #tpu.core_type<tc>, window_params = [{transform_indices = @transform_0, window_bounds = array<i64: 4, 32>}, {transform_indices = @transform_1, window_bounds = array<i64: 4, 32>}, {transform_indices = @transform_2, window_bounds = array<i64: 8, 32>}, {transform_indices = @transform_3, window_bounds = array<i64: 4, 1>}, {transform_indices = @transform_4, window_bounds = array<i64: 4, 1>}]} {
    %c0_i32 = arith.constant 0 : i32
    %0 = arith.cmpi eq, %arg1, %c0_i32 : i32
    %1 = arith.extui %0 : i1 to i32
    %c0_i32_0 = arith.constant 0 : i32
    %2 = arith.cmpi ne, %1, %c0_i32_0 : i32
    scf.if %2 {
      %cst_19 = arith.constant 0.000000e+00 : f32
      %23 = vector.broadcast %cst_19 : f32 to vector<4x1xf32>
      %c0_20 = arith.constant 0 : index
      %c0_21 = arith.constant 0 : index
      %24 = vector.load %arg7[%c0_20, %c0_21] : memref<4x1xf32, #tpu.memory_space<vmem>>, vector<4x1xf32>
      tpu.vector_store %arg7[%c0_20, %c0_21], %23 {strides = array<i32>} : memref<4x1xf32, #tpu.memory_space<vmem>>, vector<4x1xf32>,
      %cst_22 = arith.constant 0.000000e+00 : f32
      %25 = vector.broadcast %cst_22 : f32 to vector<4x1xf32>
      %c0_23 = arith.constant 0 : index
      %c0_24 = arith.constant 0 : index
      %26 = vector.load %arg8[%c0_23, %c0_24] : memref<4x1xf32, #tpu.memory_space<vmem>>, vector<4x1xf32>
      tpu.vector_store %arg8[%c0_23, %c0_24], %25 {strides = array<i32>} : memref<4x1xf32, #tpu.memory_space<vmem>>, vector<4x1xf32>,
    } else {
    }
    %c0 = arith.constant 0 : index
    %c0_1 = arith.constant 0 : index
    %3 = vector.load %arg4[%c0, %c0_1] : memref<8x32xf32, #tpu.memory_space<vmem>>, vector<8x32xf32>
    %c0_2 = arith.constant 0 : index
    %c0_3 = arith.constant 0 : index
    %4 = vector.load %arg7[%c0_2, %c0_3] : memref<4x1xf32, #tpu.memory_space<vmem>>, vector<4x1xf32>
    %c0_4 = arith.constant 0 : index
    %c0_5 = arith.constant 0 : index
    %5 = vector.load %arg2[%c0_4, %c0_5] : memref<4x32xf32, #tpu.memory_space<vmem>>, vector<4x32xf32>
    %cst = arith.constant dense<0.000000e+00> : vector<4x8xf32>
    %6 = tpu.matmul %5, %3, %cst {dimension_numbers = #tpu.dot_dimension_numbers<[1], [1], [0], [0], [0, 0, 1, 0], [], []>} : vector<4x32xf32>, vector<8x32xf32>, vector<4x8xf32> -> vector<4x8xf32>
    %7 = math.exp %6 : vector<4x8xf32>
    %cst_6 = arith.constant dense<0.000000e+00> : vector<4xf32>
    %8 = vector.multi_reduction <add>, %7, %cst_6 [1] : vector<4x8xf32> to vector<4xf32>
    %9 = vector.shape_cast %8 : vector<4xf32> to vector<4x1xf32>
    %10 = arith.addf %4, %9 : vector<4x1xf32>
    %c0_7 = arith.constant 0 : index
    %c0_8 = arith.constant 0 : index
    %11 = vector.load %arg7[%c0_7, %c0_8] : memref<4x1xf32, #tpu.memory_space<vmem>>, vector<4x1xf32>
    tpu.vector_store %arg7[%c0_7, %c0_8], %10 {strides = array<i32>} : memref<4x1xf32, #tpu.memory_space<vmem>>, vector<4x1xf32>,
    %c0_9 = arith.constant 0 : index
    %c0_10 = arith.constant 0 : index
    %12 = vector.load %arg8[%c0_9, %c0_10] : memref<4x1xf32, #tpu.memory_space<vmem>>, vector<4x1xf32>
    %c0_11 = arith.constant 0 : index
    %c0_12 = arith.constant 0 : index
    %13 = vector.load %arg3[%c0_11, %c0_12] : memref<4x32xf32, #tpu.memory_space<vmem>>, vector<4x32xf32>
    %cst_13 = arith.constant dense<0.000000e+00> : vector<4x8xf32>
    %14 = tpu.matmul %13, %3, %cst_13 {dimension_numbers = #tpu.dot_dimension_numbers<[1], [1], [0], [0], [0, 0, 1, 0], [], []>} : vector<4x32xf32>, vector<8x32xf32>, vector<4x8xf32> -> vector<4x8xf32>
    %15 = math.exp %14 : vector<4x8xf32>
    %cst_14 = arith.constant dense<0.000000e+00> : vector<4xf32>
    %16 = vector.multi_reduction <add>, %15, %cst_14 [1] : vector<4x8xf32> to vector<4xf32>
    %17 = vector.shape_cast %16 : vector<4xf32> to vector<4x1xf32>
    %18 = arith.addf %12, %17 : vector<4x1xf32>
    %c0_15 = arith.constant 0 : index
    %c0_16 = arith.constant 0 : index
    %19 = vector.load %arg8[%c0_15, %c0_16] : memref<4x1xf32, #tpu.memory_space<vmem>>, vector<4x1xf32>
    tpu.vector_store %arg8[%c0_15, %c0_16], %18 {strides = array<i32>} : memref<4x1xf32, #tpu.memory_space<vmem>>, vector<4x1xf32>,
    %c0_i32_17 = arith.constant 0 : i32
    %20 = arith.cmpi eq, %arg1, %c0_i32_17 : i32
    %21 = arith.extui %20 : i1 to i32
    %c0_i32_18 = arith.constant 0 : i32
    %22 = arith.cmpi ne, %21, %c0_i32_18 : i32
    scf.if %22 {
      %c0_19 = arith.constant 0 : index
      %c0_20 = arith.constant 0 : index
      %23 = vector.load %arg2[%c0_19, %c0_20] : memref<4x32xf32, #tpu.memory_space<vmem>>, vector<4x32xf32>
      %c0_21 = arith.constant 0 : index
      %c0_22 = arith.constant 0 : index
      %24 = vector.load %arg3[%c0_21, %c0_22] : memref<4x32xf32, #tpu.memory_space<vmem>>, vector<4x32xf32>
      %25 = arith.mulf %23, %24 : vector<4x32xf32>
      %cst_23 = arith.constant dense<0.000000e+00> : vector<4xf32>
      %26 = vector.multi_reduction <add>, %25, %cst_23 [1] : vector<4x32xf32> to vector<4xf32>
      %27 = vector.shape_cast %26 : vector<4xf32> to vector<4x1xf32>
      %cst_24 = arith.constant 2.000000e+00 : f32
      %28 = vector.broadcast %cst_24 : f32 to vector<4x1xf32>
      %29 = arith.mulf %27, %28 : vector<4x1xf32>
      %30 = arith.mulf %23, %23 : vector<4x32xf32>
      %cst_25 = arith.constant dense<0.000000e+00> : vector<4xf32>
      %31 = vector.multi_reduction <add>, %30, %cst_25 [1] : vector<4x32xf32> to vector<4xf32>
      %32 = vector.shape_cast %31 : vector<4xf32> to vector<4x1xf32>
      %cst_26 = arith.constant 2.000000e+00 : f32
      %33 = vector.broadcast %cst_26 : f32 to vector<4x1xf32>
      %34 = arith.mulf %32, %33 : vector<4x1xf32>
      %35 = arith.mulf %24, %24 : vector<4x32xf32>
      %cst_27 = arith.constant dense<0.000000e+00> : vector<4xf32>
      %36 = vector.multi_reduction <add>, %35, %cst_27 [1] : vector<4x32xf32> to vector<4xf32>
      %37 = vector.shape_cast %36 : vector<4xf32> to vector<4x1xf32>
      %cst_28 = arith.constant 2.000000e+00 : f32
      %38 = vector.broadcast %cst_28 : f32 to vector<4x1xf32>
      %39 = arith.mulf %37, %38 : vector<4x1xf32>
      %c0_29 = arith.constant 0 : index
      %c0_30 = arith.constant 0 : index
      %40 = vector.load %arg7[%c0_29, %c0_30] : memref<4x1xf32, #tpu.memory_space<vmem>>, vector<4x1xf32>
      %41 = math.exp %34 : vector<4x1xf32>
      %42 = arith.subf %40, %41 : vector<4x1xf32>
      %c0_31 = arith.constant 0 : index
      %c0_32 = arith.constant 0 : index
      %43 = vector.load %arg8[%c0_31, %c0_32] : memref<4x1xf32, #tpu.memory_space<vmem>>, vector<4x1xf32>
      %44 = math.exp %39 : vector<4x1xf32>
      %45 = arith.subf %43, %44 : vector<4x1xf32>
      %46 = math.log %42 : vector<4x1xf32>
      %47 = arith.subf %46, %29 : vector<4x1xf32>
      %c0_33 = arith.constant 0 : index
      %c0_34 = arith.constant 0 : index
      %48 = vector.load %arg5[%c0_33, %c0_34] : memref<4x1xf32, #tpu.memory_space<vmem>>, vector<4x1xf32>
      tpu.vector_store %arg5[%c0_33, %c0_34], %47 {strides = array<i32>} : memref<4x1xf32, #tpu.memory_space<vmem>>, vector<4x1xf32>,
      %49 = math.log %45 : vector<4x1xf32>
      %50 = arith.subf %49, %29 : vector<4x1xf32>
      %c0_35 = arith.constant 0 : index
      %c0_36 = arith.constant 0 : index
      %51 = vector.load %arg6[%c0_35, %c0_36] : memref<4x1xf32, #tpu.memory_space<vmem>>, vector<4x1xf32>
      tpu.vector_store %arg6[%c0_35, %c0_36], %50 {strides = array<i32>} : memref<4x1xf32, #tpu.memory_space<vmem>>, vector<4x1xf32>,
    } else {
    }
    return
  }
  func.func @transform_0(%arg0: i32, %arg1: i32) -> (i32, i32) {
    %c0_i32 = arith.constant 0 : i32
    %c0_i32_0 = arith.constant 0 : i32
    return %arg0, %c0_i32 : i32, i32
  }
  func.func @transform_1(%arg0: i32, %arg1: i32) -> (i32, i32) {
    %c0_i32 = arith.constant 0 : i32
    %c0_i32_0 = arith.constant 0 : i32
    return %arg0, %c0_i32 : i32, i32
  }
  func.func @transform_2(%arg0: i32, %arg1: i32) -> (i32, i32) {
    %c0_i32 = arith.constant 0 : i32
    %c0_i32_0 = arith.constant 0 : i32
    return %arg1, %c0_i32 : i32, i32
  }
  func.func @transform_3(%arg0: i32, %arg1: i32) -> (i32, i32) {
    %c0_i32 = arith.constant 0 : i32
    %c0_i32_0 = arith.constant 0 : i32
    return %arg0, %c0_i32 : i32, i32
  }
  func.func @transform_4(%arg0: i32, %arg1: i32) -> (i32, i32) {
    %c0_i32 = arith.constant 0 : i32
    %c0_i32_0 = arith.constant 0 : i32
    return %arg0, %c0_i32 : i32, i32
  }
}

</mosaic_0001>

<llo_original>
// kernel: tpu_custom_call.1
$region0: #{tpu_custom_call.1}
  #allocation0 [shape = 'u32[]', space=smem, size = 0x4, offset = 0x4, fixed_abs, tag = 'smem constant byte address 0x4 - core index']
  #allocation1 [shape = 'u32[144,128]{1,0:T(1,128)}', space=vmem, size = 0x12000, scoped, tag = 'internal scratch']
  #allocation2 [shape = 'f32[4,1]{1,0:T(4,128)}', space=vmem, size = 0x800, scoped, tag = 'scratch operand']
  #allocation3 [shape = 'f32[4,1]{1,0:T(4,128)}', space=vmem, size = 0x800, scoped, tag = 'scratch operand']
  %s0 = inlined_call_operand.hbm [shape: f32[4,32], index: 0, kind: input, shape index: {}]
  %s1 = inlined_call_operand.hbm [shape: f32[4,32], index: 1, kind: input, shape index: {}]
  %s2 = inlined_call_operand.hbm [shape: f32[8,32], index: 2, kind: input, shape index: {}]
  %s3 = inlined_call_operand.vmem [shape: f32[4,1], index: 3, kind: output, shape index: {0}]
  %s4 = inlined_call_operand.vmem [shape: f32[4,1], index: 4, kind: output, shape index: {1}]
  %5 = xla_tuple %s3, %s4
  %s6 = sld [smem:[#allocation0]]
  $region50: #{tpu_custom_call.1} parent=0
    _
  %s8 = ssub.s32 1, %s6
  %s9 = scalar_select 0, %s8, %s6
  $region1: #{tpu_custom_call.1} parent=0
    #allocation4 [shape = 'u8[2048]{0}', space=vmem, size = 0x800, scoped, tag = 'input window, operand 0, single buffered']
    #allocation5 [shape = 's32[1]{0}', space=sflag, size = 0x4, scoped, tag = 'scoped memory for tpu_custom_call.1']
    #allocation6 [shape = 'u8[2048]{0}', space=vmem, size = 0x800, scoped, tag = 'input window, operand 1, single buffered']
    #allocation7 [shape = 's32[1]{0}', space=sflag, size = 0x4, scoped, tag = 'scoped memory for tpu_custom_call.1']
    #allocation8 [shape = 'u8[4096]{0}', space=vmem, size = 0x1000, scoped, tag = 'input window, operand 2, single buffered']
    %10 = vsyncpa [#allocation5], 0
    %11 = vsyncpa [#allocation7], 0
    // Predicated region
    $region2: #{tpu_custom_call.1} parent=1 // pred_check
      _
    $region3: #{tpu_custom_call.1} parent=1 // pred_check_branch
      %13 = sbr.rel (0) target = $region5
    $region4: #{tpu_custom_call.1} parent=1 // pred_region
      %s15 = ssub.s32 64, 64
      %16 = vsyncadd [#allocation5], %s15
      %s18 = sshll.u32 [#allocation4], 4
      %s19 = int_to_ptr.vmem [resolvable:$true] %s18
      %21 = dma.hbm_to_vmem [thread:$0]  %s0, 64, %s19, [#allocation5]
    $region5: #{tpu_custom_call.1} parent=1 // pred_fallthru
      _
    // Predicated region
    $region6: #{tpu_custom_call.1} parent=1 // pred_check
      _
    $region7: #{tpu_custom_call.1} parent=1 // pred_check_branch
      %23 = sbr.rel (0) target = $region9
    $region8: #{tpu_custom_call.1} parent=1 // pred_region
      %s25 = ssub.s32 64, 64
      %26 = vsyncadd [#allocation7], %s25
      %s28 = sshll.u32 [#allocation6], 4
      %s29 = int_to_ptr.vmem [resolvable:$true] %s28
      %31 = dma.hbm_to_vmem [thread:$0]  %s1, 64, %s29, [#allocation7]
    $region9: #{tpu_custom_call.1} parent=1 // pred_fallthru
      _
    // Predicated region
    $region10: #{tpu_custom_call.1} parent=1 // pred_check
      _
    $region11: #{tpu_custom_call.1} parent=1 // pred_check_branch
      %33 = sbr.rel (0) target = $region13
    $region12: #{tpu_custom_call.1} parent=1 // pred_region
      %s35 = ssub.s32 128, 128
      %36 = vsyncadd [#allocation7], %s35
      %s38 = sshll.u32 [#allocation8], 4
      %s39 = int_to_ptr.vmem [resolvable:$true] %s38
      %41 = dma.hbm_to_vmem [thread:$0]  %s2, 128, %s39, [#allocation7]
    $region13: #{tpu_custom_call.1} parent=1 // pred_fallthru
      _
    // Predicated region
    $region14: #{tpu_custom_call.1} parent=1 // pred_check
      _
    $region15: #{tpu_custom_call.1} parent=1 // pred_check_branch
      %43 = sbr.rel (0) target = $region17
    $region16: #{tpu_custom_call.1} parent=1 // pred_region
      %44 = dma.done [#allocation5], 64
    $region17: #{tpu_custom_call.1} parent=1 // pred_fallthru
      _
    // Predicated region
    $region18: #{tpu_custom_call.1} parent=1 // pred_check
      _
    $region19: #{tpu_custom_call.1} parent=1 // pred_check_branch
      %46 = sbr.rel (0) target = $region21
    $region20: #{tpu_custom_call.1} parent=1 // pred_region
      %47 = dma.done [#allocation7], 64
    $region21: #{tpu_custom_call.1} parent=1 // pred_fallthru
      _
    // Predicated region
    $region22: #{tpu_custom_call.1} parent=1 // pred_check
      _
    $region23: #{tpu_custom_call.1} parent=1 // pred_check_branch
      %49 = sbr.rel (0) target = $region25
    $region24: #{tpu_custom_call.1} parent=1 // pred_region
      %50 = dma.done [#allocation7], 128
    $region25: #{tpu_custom_call.1} parent=1 // pred_fallthru
      _
    %p51 = scmp.eq.s32.totalorder 0, 0
    // Predicated region
    $region26: #{tpu_custom_call.1} parent=1 // pred_check
      %p52 = pneg %p51
    $region27: #{tpu_custom_call.1} parent=1 // pred_check_branch
      %54 = sbr.rel (%p52) target = $region29
    $region28: #{tpu_custom_call.1} parent=1 // pred_region
      %vm55 = vcmask 3072
      %56 = vst.msk [vmem:[#allocation2] sm:$0xf] %vm55, 0.0
      %57 = vst.msk [vmem:[#allocation3] sm:$0xf] %vm55, 0.0
    $region29: #{tpu_custom_call.1} parent=1 // pred_fallthru
      _
    %v58 = vld [vmem:[#allocation8] sm:$0xff]
    %v59 = vld [vmem:[#allocation2] sm:$0xf]
    %v60 = vld [vmem:[#allocation4] sm:$0xf]
    %vm61 = vcmask 261120
    %v63 = vsel %vm61, %v60, 0
    %v66 = vsel %vm61, %v58, 0
    %68 = vmatprep.subr.mxu0 0.0
    %69 = vmatpush1.xpose.msra.mxu0 0.0
    %70 = vmatprep.subr.mxu0 0.0
    %71 = vmatpush1.xpose.msra.mxu0 0.0
    %72 = vmatprep.subr.mxu0 0.0
    %73 = vmatpush1.xpose.msra.mxu0 0.0
    %74 = vmatprep.subr.mxu0 0.0
    %75 = vmatpush1.xpose.msra.mxu0 0.0
    %76 = vmatprep.subr.mxu0 0.0
    %77 = vmatpush1.xpose.msra.mxu0 0.0
    %78 = vmatprep.subr.mxu0 0.0
    %79 = vmatpush1.xpose.msra.mxu0 0.0
    %80 = vmatprep.subr.mxu0 0.0
    %81 = vmatpush1.xpose.msra.mxu0 0.0
    %82 = vmatprep.subr.mxu0 0.0
    %83 = vmatpush1.xpose.msra.mxu0 0.0
    %84 = vmatprep.subr.mxu0 0.0
    %85 = vmatpush1.xpose.msra.mxu0 0.0
    %86 = vmatprep.subr.mxu0 0.0
    %87 = vmatpush1.xpose.msra.mxu0 0.0
    %88 = vmatprep.subr.mxu0 0.0
    %89 = vmatpush1.xpose.msra.mxu0 0.0
    %90 = vmatprep.subr.mxu0 0.0
    %91 = vmatpush1.xpose.msra.mxu0 0.0
    %92 = vmatprep.subr.mxu0 0.0
    %93 = vmatpush1.xpose.msra.mxu0 0.0
    %94 = vmatprep.subr.mxu0 0.0
    %95 = vmatpush1.xpose.msra.mxu0 0.0
    %96 = vmatprep.subr.mxu0 0.0
    %97 = vmatpush1.xpose.msra.mxu0 0.0
    %98 = vmatprep.subr.mxu0 0.0
    %99 = vmatpush1.xpose.msra.mxu0 %v66
    %100 = vmatprep.subr.mxu0 0.0
    %101 = vmatpush2.xpose.msra.mxu0 0.0
    %102 = vmatprep.subr.mxu0 0.0
    %103 = vmatpush2.xpose.msra.mxu0 0.0
    %104 = vmatprep.subr.mxu0 0.0
    %105 = vmatpush2.xpose.msra.mxu0 0.0
    %106 = vmatprep.subr.mxu0 0.0
    %107 = vmatpush2.xpose.msra.mxu0 0.0
    %108 = vmatprep.subr.mxu0 0.0
    %109 = vmatpush2.xpose.msra.mxu0 0.0
    %110 = vmatprep.subr.mxu0 0.0
    %111 = vmatpush2.xpose.msra.mxu0 0.0
    %112 = vmatprep.subr.mxu0 0.0
    %113 = vmatpush2.xpose.msra.mxu0 0.0
    %114 = vmatprep.subr.mxu0 0.0
    %115 = vmatpush2.xpose.msra.mxu0 0.0
    %116 = vmatprep.subr.mxu0 0.0
    %117 = vmatpush2.xpose.msra.mxu0 0.0
    %118 = vmatprep.subr.mxu0 0.0
    %119 = vmatpush2.xpose.msra.mxu0 0.0
    %120 = vmatprep.subr.mxu0 0.0
    %121 = vmatpush2.xpose.msra.mxu0 0.0
    %122 = vmatprep.subr.mxu0 0.0
    %123 = vmatpush2.xpose.msra.mxu0 0.0
    %124 = vmatprep.subr.mxu0 0.0
    %125 = vmatpush2.xpose.msra.mxu0 0.0
    %126 = vmatprep.subr.mxu0 0.0
    %127 = vmatpush2.xpose.msra.mxu0 0.0
    %128 = vmatprep.subr.mxu0 0.0
    %129 = vmatpush2.xpose.msra.mxu0 0.0
    %130 = vmatprep.subr.mxu0 0.0
    %131 = vmatpush2.xpose.msra.mxu0 0.0
    %132 = vmatprep.mubr.f32.mxu0 0.0
    %133 = vmatmul.mubr.f32.gmra.mxu0 %v63
    %v134 = vpop.f32.mrf.mxu0
    %v135 = vadd.f32 0.0, %v134
    %v136 = vpop.f32.mrf.mxu0
    %137 = vdwg.mxu0
    %v138 = vmul.f32 %v135, 1.442695
    %v139 = vpow.pop %v138
    %vm140 = vcmask 60416
    %v141 = vsel %vm140, %v139, 0.0
    %142 = vadd.xlane.f32.xlu0 %v141
    %v143 = vpop.xlane.xlu0 %142
    %v144 = vadd.f32 %v59, %v143
    %vm145 = vcmask 3072
    %146 = vst.msk [vmem:[#allocation2] sm:$0xf] %vm145, %v144
    %v147 = vld [vmem:[#allocation3] sm:$0xf]
    %v148 = vld [vmem:[#allocation6] sm:$0xf]
    %v150 = vsel %vm61, %v148, 0
    %152 = vmatprep.subr.mxu0 0.0
    %153 = vmatpush1.xpose.msra.mxu0 0.0
    %154 = vmatprep.subr.mxu0 0.0
    %155 = vmatpush1.xpose.msra.mxu0 0.0
    %156 = vmatprep.subr.mxu0 0.0
    %157 = vmatpush1.xpose.msra.mxu0 0.0
    %158 = vmatprep.subr.mxu0 0.0
    %159 = vmatpush1.xpose.msra.mxu0 0.0
    %160 = vmatprep.subr.mxu0 0.0
    %161 = vmatpush1.xpose.msra.mxu0 0.0
    %162 = vmatprep.subr.mxu0 0.0
    %163 = vmatpush1.xpose.msra.mxu0 0.0
    %164 = vmatprep.subr.mxu0 0.0
    %165 = vmatpush1.xpose.msra.mxu0 0.0
    %166 = vmatprep.subr.mxu0 0.0
    %167 = vmatpush1.xpose.msra.mxu0 0.0
    %168 = vmatprep.subr.mxu0 0.0
    %169 = vmatpush1.xpose.msra.mxu0 0.0
    %170 = vmatprep.subr.mxu0 0.0
    %171 = vmatpush1.xpose.msra.mxu0 0.0
    %172 = vmatprep.subr.mxu0 0.0
    %173 = vmatpush1.xpose.msra.mxu0 0.0
    %174 = vmatprep.subr.mxu0 0.0
    %175 = vmatpush1.xpose.msra.mxu0 0.0
    %176 = vmatprep.subr.mxu0 0.0
    %177 = vmatpush1.xpose.msra.mxu0 0.0
    %178 = vmatprep.subr.mxu0 0.0
    %179 = vmatpush1.xpose.msra.mxu0 0.0
    %180 = vmatprep.subr.mxu0 0.0
    %181 = vmatpush1.xpose.msra.mxu0 0.0
    %182 = vmatprep.subr.mxu0 0.0
    %183 = vmatpush1.xpose.msra.mxu0 %v66
    %184 = vmatprep.subr.mxu0 0.0
    %185 = vmatpush2.xpose.msra.mxu0 0.0
    %186 = vmatprep.subr.mxu0 0.0
    %187 = vmatpush2.xpose.msra.mxu0 0.0
    %188 = vmatprep.subr.mxu0 0.0
    %189 = vmatpush2.xpose.msra.mxu0 0.0
    %190 = vmatprep.subr.mxu0 0.0
    %191 = vmatpush2.xpose.msra.mxu0 0.0
    %192 = vmatprep.subr.mxu0 0.0
    %193 = vmatpush2.xpose.msra.mxu0 0.0
    %194 = vmatprep.subr.mxu0 0.0
    %195 = vmatpush2.xpose.msra.mxu0 0.0
    %196 = vmatprep.subr.mxu0 0.0
    %197 = vmatpush2.xpose.msra.mxu0 0.0
    %198 = vmatprep.subr.mxu0 0.0
    %199 = vmatpush2.xpose.msra.mxu0 0.0
    %200 = vmatprep.subr.mxu0 0.0
    %201 = vmatpush2.xpose.msra.mxu0 0.0
    %202 = vmatprep.subr.mxu0 0.0
    %203 = vmatpush2.xpose.msra.mxu0 0.0
    %204 = vmatprep.subr.mxu0 0.0
    %205 = vmatpush2.xpose.msra.mxu0 0.0
    %206 = vmatprep.subr.mxu0 0.0
    %207 = vmatpush2.xpose.msra.mxu0 0.0
    %208 = vmatprep.subr.mxu0 0.0
    %209 = vmatpush2.xpose.msra.mxu0 0.0
    %210 = vmatprep.subr.mxu0 0.0
    %211 = vmatpush2.xpose.msra.mxu0 0.0
    %212 = vmatprep.subr.mxu0 0.0
    %213 = vmatpush2.xpose.msra.mxu0 0.0
    %214 = vmatprep.subr.mxu0 0.0
    %215 = vmatpush2.xpose.msra.mxu0 0.0
    %216 = vmatprep.mubr.f32.mxu0 0.0
    %217 = vmatmul.mubr.f32.gmra.mxu0 %v150
    %v218 = vpop.f32.mrf.mxu0
    %v219 = vadd.f32 0.0, %v218
    %v220 = vpop.f32.mrf.mxu0
    %221 = vdwg.mxu0
    %v222 = vmul.f32 %v219, 1.442695
    %v223 = vpow.pop %v222
    %v224 = vsel %vm140, %v223, 0.0
    %225 = vadd.xlane.f32.xlu0 %v224
    %v226 = vpop.xlane.xlu0 %225
    %v227 = vadd.f32 %v147, %v226
    %228 = vst.msk [vmem:[#allocation3] sm:$0xf] %vm145, %v227
    // Predicated region
    $region30: #{tpu_custom_call.1} parent=1 // pred_check
      %p229 = pneg %p51
    $region31: #{tpu_custom_call.1} parent=1 // pred_check_branch
      %231 = sbr.rel (%p229) target = $region33
    $region32: #{tpu_custom_call.1} parent=1 // pred_region
      %v232 = vld [vmem:[#allocation4] sm:$0xf]
      %v233 = vld [vmem:[#allocation6] sm:$0xf]
      %v234 = vmul.f32 %v232, %v233
      %vm235 = vcmask 257024
      %v236 = vsel %vm235, %v234, 0.0
      %237 = vadd.xlane.f32.xlu0 %v236
      %v238 = vpop.xlane.xlu0 %237
      %v239 = vmul.f32 %v238, 2.0
      %v240 = vmul.f32 %v232, %v232
      %v241 = vsel %vm235, %v240, 0.0
      %242 = vadd.xlane.f32.xlu0 %v241
      %v243 = vpop.xlane.xlu0 %242
      %v244 = vmul.f32 %v243, 2.0
      %v245 = vmul.f32 %v233, %v233
      %v246 = vsel %vm235, %v245, 0.0
      %247 = vadd.xlane.f32.xlu0 %v246
      %v248 = vpop.xlane.xlu0 %247
      %v249 = vmul.f32 %v248, 2.0
      %v250 = vld [vmem:[#allocation2] sm:$0xf]
      %v251 = vmul.f32 %v244, 1.442695
      %v252 = vpow.pop %v251
      %v253 = vsub.f32 %v250, %v252
      %v254 = vld [vmem:[#allocation3] sm:$0xf]
      %v255 = vmul.f32 %v249, 1.442695
      %v256 = vpow.pop %v255
      %v257 = vsub.f32 %v254, %v256
      %v258 = vlog2.pop %v253
      %v259 = vmul.f32 %v258, 0.6931472
      %v260 = vsub.f32 %v259, %v239
      %261 = vst.msk [vmem:[%s3] sm:$0xf] %vm145, %v260
      %v262 = vlog2.pop %v257
      %v263 = vmul.f32 %v262, 0.6931472
      %v264 = vsub.f32 %v263, %v239
      %265 = vst.msk [vmem:[%s4] sm:$0xf] %vm145, %v264
    $region33: #{tpu_custom_call.1} parent=1 // pred_fallthru
      _
    // Predicated region
    $region34: #{tpu_custom_call.1} parent=1 // pred_check
      _
    $region35: #{tpu_custom_call.1} parent=1 // pred_check_branch
      %267 = sbr.rel (0) target = $region37
    $region36: #{tpu_custom_call.1} parent=1 // pred_region
      _
    $region37: #{tpu_custom_call.1} parent=1 // pred_fallthru
      _
    // Predicated region
    $region38: #{tpu_custom_call.1} parent=1 // pred_check
      _
    $region39: #{tpu_custom_call.1} parent=1 // pred_check_branch
      %269 = sbr.rel (0) target = $region41
    $region40: #{tpu_custom_call.1} parent=1 // pred_region
      _
    $region41: #{tpu_custom_call.1} parent=1 // pred_fallthru
      _
    // Predicated region
    $region42: #{tpu_custom_call.1} parent=1 // pred_check
      _
    $region43: #{tpu_custom_call.1} parent=1 // pred_check_branch
      %271 = sbr.rel (0) target = $region45
    $region44: #{tpu_custom_call.1} parent=1 // pred_region
      _
    $region45: #{tpu_custom_call.1} parent=1 // pred_fallthru
      _
    // Predicated region
    $region46: #{tpu_custom_call.1} parent=1 // pred_check
      _
    $region47: #{tpu_custom_call.1} parent=1 // pred_check_branch
      %273 = sbr.rel (0) target = $region49
    $region48: #{tpu_custom_call.1} parent=1 // pred_region
      _
    $region49: #{tpu_custom_call.1} parent=1 // pred_fallthru
      _
    %274 = vsyncpa [#allocation5], 1
    %275 = vsyncpa [#allocation7], 1

</llo_original>
